<compile_context>
chip_gen: v7x
topology: tpu7x:2x2x1
jax: 0.10.0
libtpu: 0.0.40
codegen_flags: <defaults>
</compile_context>

<pallas_src>
import functools

import jax
import jax.numpy as jnp
from jax.experimental import pallas as pl
from jax.experimental.pallas import tpu as pltpu


def _choose_tiling(H, W, Cin, G, band_rows=None, vmem_budget_bytes=24 << 20):
    """Pick (band_rows, halo_block_rows).

    halo_block_rows (rpb) = fewest image rows whose pixel count is a multiple
    of 128 (so the halo BlockSpecs are lane-aligned); band_rows must be a
    multiple of rpb and divide H.
    """
    rpb = None
    for k in range(1, H + 1):
        if H % k == 0 and (k * W) % 128 == 0:
            rpb = k
            break
    if rpb is None:
        raise ValueError(f"cannot lane-align rows for H={H}, W={W}")

    if band_rows is not None:
        if H % band_rows or band_rows % rpb:
            raise ValueError(
                f"band_rows={band_rows} must divide H={H} and be a multiple of {rpb}")
        return band_rows, rpb

    # Largest band dividing H whose per-step working set (in + out blocks
    # double-buffered + f32 accumulator + bf16 shifted band) stays in budget.
    bytes_per_row = W * 4 * (4 * Cin + 3 * G)
    band = rpb
    cand = rpb
    while cand <= H:
        if (H % cand == 0 and cand * bytes_per_row <= vmem_budget_bytes
                and cand * W <= (1 << 17)):
            band = cand
        cand += rpb
    return band, rpb


def _rdb_conv_kernel(x_ref, top_ref, bot_ref, w_ref, b_ref, o_ref, *,
                     W, Cin, G, K, band, rpb):
    # x_ref  : (1, Cin, band*W)      current band, f32, pixels flat on lanes
    # top_ref: (1, Cin, rpb*W)       row-group containing the row just above
    # bot_ref: (1, Cin, rpb*W)       row-group containing the row just below
    # w_ref  : (K*K, G, Cin)         conv weights, tap-major, bf16
    # b_ref  : (G, 128)              bias, lane-replicated, f32
    # o_ref  : (1, Cin+G, band*W)    [x ; ReLU(conv(x))] along channels
    band_px = band * W
    b_idx = pl.program_id(1)
    nb = pl.num_programs(1)

    xb = x_ref[0]                                         # (Cin, band*W) f32

    # ---- concat passthrough: first Cin output channels are x (lane-dense) ----
    o_ref[0, :Cin, :] = xb

    # ---- 1-row halos; zero them at the true image top / bottom ----
    top_row = top_ref[0, :, (rpb - 1) * W:] * (b_idx > 0).astype(xb.dtype)
    bot_row = bot_ref[0, :, :W] * (b_idx < nb - 1).astype(xb.dtype)

    # ---- halo-extended band (+ one zero row each side so every tap window is
    #      a plain in-bounds static lane slice); bf16 operands for the MXU ----
    zrow = jnp.zeros((Cin, W), xb.dtype)
    x_ext = jnp.concatenate([zrow, top_row, xb, bot_row, zrow],
                            axis=1).astype(jnp.bfloat16)  # (Cin, (band+4)*W)

    # Column-validity masks (only the masks are kept live, not masked copies).
    pad = (K - 1) // 2
    cols = jax.lax.broadcasted_iota(jnp.int32, (1, band_px), 1) % W
    col_ok = {dx: (cols + dx >= 0) & (cols + dx <= W - 1)
              for dx in range(-pad, pad + 1) if dx != 0}

    # ---- 9 accumulating per-tap MXU matmuls (no im2col scratch) ----
    acc = jnp.zeros((G, band_px), jnp.float32)
    for ky in range(K):
        for kx in range(K):
            dy, dx = ky - pad, kx - pad
            start = (dy + pad + 1) * W + dx               # offset into x_ext
            win = x_ext[:, start:start + band_px]         # (Cin, band*W) bf16
            if dx in col_ok:
                win = jnp.where(col_ok[dx], win, jnp.zeros_like(win))
            acc = acc + jnp.dot(w_ref[ky * K + kx], win,
                                preferred_element_type=jnp.float32)

    # ---- bias + ReLU -> the G new output channels ----
    # (o_ref channel offset Cin is not always a sublane multiple; real RDN
    #  layers use Cin % 8 == 0, so the store is aligned there.)
    o_ref[0, Cin:, :] = jnp.maximum(acc + b_ref[:, :1], 0.0).astype(o_ref.dtype)


def rdb_conv(x_nchw, weight, bias, kSize=3, band_rows=None):
    """x_nchw: (N, Cin, H, W); weight: (G, Cin, K, K) PyTorch OIHW; bias: (G,)."""
    N, Cin, H, W = x_nchw.shape
    G = weight.shape[0]
    K = kSize
    if K != 3:
        raise NotImplementedError("halo logic assumes 3x3 (pad=1); RDN uses kSize=3")
    P = H * W
    Cout = Cin + G

    band, rpb = _choose_tiling(H, W, Cin, G, band_rows)
    nb = H // band
    band_px = band * W
    halo_px = rpb * W
    steps = band // rpb              # halo row-groups per band
    n_halo_blocks = H // rpb

    # Layout plumbing (all free or tiny):
    x_flat = x_nchw.reshape(N, Cin, P)                     # pure reshape
    w_taps = (jnp.transpose(weight, (2, 3, 0, 1))          # (K,K,G,Cin) tap-major
              .reshape(K * K, G, Cin).astype(jnp.bfloat16))
    bias_rep = jnp.broadcast_to(                           # lane-replicated bias
        bias.astype(jnp.float32).reshape(G, 1), (G, 128))

    kernel = functools.partial(_rdb_conv_kernel, W=W, Cin=Cin, G=G, K=K,
                               band=band, rpb=rpb)

    flops = 2 * N * G * K * K * Cin * P
    bytes_accessed = (N * Cin * P * 4                      # x band reads
                      + N * nb * 2 * Cin * halo_px * 4     # halo over-fetch
                      + N * Cout * P * 4                   # output write
                      + w_taps.size * 2 + bias_rep.size * 4)

    out_flat = pl.pallas_call(
        kernel,
        out_shape=jax.ShapeDtypeStruct((N, Cout, P), x_nchw.dtype),
        grid_spec=pltpu.PrefetchScalarGridSpec(
            num_scalar_prefetch=0,
            grid=(N, nb),
            in_specs=[
                # the band itself (auto double-buffered)
                pl.BlockSpec((1, Cin, band_px), lambda n, b: (n, 0, b)),
                # row-groups holding the 1-row halo above / below, clamped
                # at the image boundary (zeroed in-kernel at the true edges)
                pl.BlockSpec((1, Cin, halo_px),
                             lambda n, b: (n, 0, jnp.maximum(b * steps - 1, 0))),
                pl.BlockSpec((1, Cin, halo_px),
                             lambda n, b: (n, 0, jnp.minimum((b + 1) * steps,
                                                             n_halo_blocks - 1))),
                pl.BlockSpec((K * K, G, Cin), lambda n, b: (0, 0, 0)),
                pl.BlockSpec((G, 128), lambda n, b: (0, 0)),
            ],
            out_specs=pl.BlockSpec((1, Cout, band_px), lambda n, b: (n, 0, b)),
        ),
        compiler_params=pltpu.CompilerParams(
            dimension_semantics=("parallel", "parallel"),
            vmem_limit_bytes=48 * 1024 * 1024,
        ),
        cost_estimate=pl.CostEstimate(flops=flops, transcendentals=0,
                                      bytes_accessed=bytes_accessed),
    )(x_flat, x_flat, x_flat, w_taps, bias_rep)

    return out_flat.reshape(N, Cout, H, W)


def _reference(x_nchw, weight, bias, kSize=3):
    """Matches the kernel's numerics: bf16 conv operands, f32 accumulation."""
    pad = (kSize - 1) // 2
    xq = x_nchw.astype(jnp.bfloat16).astype(jnp.float32)
    wq = weight.astype(jnp.bfloat16).astype(jnp.float32)
    conv = jax.lax.conv_general_dilated(
        xq, wq,
        window_strides=(1, 1),
        padding=((pad, pad), (pad, pad)),
        dimension_numbers=("NCHW", "OIHW", "NCHW"),
        precision=jax.lax.Precision.HIGHEST,
    ) + bias.reshape(1, -1, 1, 1)
    return jnp.concatenate([x_nchw, jnp.maximum(conv, 0.0)], axis=1)


if __name__ == "__main__":
    # small shapes consistent with the module: N=2, Cin=4, G=8, H=W=16, k=3
    N, Cin, G, H, W, K = 2, 4, 8, 16, 16, 3
    key = jax.random.PRNGKey(0)
    kx, kw, kb = jax.random.split(key, 3)

    x = jax.random.normal(kx, (N, Cin, H, W), dtype=jnp.float32)
    weight = jax.random.normal(kw, (G, Cin, K, K), dtype=jnp.float32) * 0.1
    bias = jax.random.normal(kb, (G,), dtype=jnp.float32) * 0.1

    ref = _reference(x, weight, bias, kSize=K)

    # default (single whole-image band) and explicit 2-band tiling (exercises
    # the halo path at both image boundaries and interior band edges)
    for band_rows in (None, 8):
        out = rdb_conv(x, weight, bias, kSize=K, band_rows=band_rows)
        jax.block_until_ready(out)
        assert out.shape == (N, Cin + G, H, W), out.shape
        assert jnp.array_equal(out[:, :Cin], x), "passthrough channels must be exact"
        err = float(jnp.max(jnp.abs(out - ref)))
        assert err < 1e-3, (band_rows, err)

    print("KERNEL_OK")
</pallas_src>

<mosaic_0001>
module attributes {stable_mosaic.version = 11 : i64} {
  func.func @_rdb_conv_kernel(%arg0: i32, %arg1: i32, %arg2: memref<1x4x256xf32, #tpu.memory_space<vmem>>, %arg3: memref<1x4x128xf32, #tpu.memory_space<vmem>>, %arg4: memref<1x4x128xf32, #tpu.memory_space<vmem>>, %arg5: memref<9x8x4xbf16, #tpu.memory_space<vmem>>, %arg6: memref<8x128xf32, #tpu.memory_space<vmem>>, %arg7: memref<1x12x256xf32, #tpu.memory_space<vmem>>) attributes {dimension_semantics = [#tpu.dimension_semantics<parallel>, #tpu.dimension_semantics<parallel>], iteration_bounds = array<i64: 2, 1>, scalar_prefetch = 0 : i64, scratch_operands = 0 : i64, tpu.core_type = #tpu.core_type<tc>, window_params = [{transform_indices = @transform_0, window_bounds = array<i64: 1, 4, 256>}, {transform_indices = @transform_1, window_bounds = array<i64: 1, 4, 128>}, {transform_indices = @transform_2, window_bounds = array<i64: 1, 4, 128>}, {pipeline_mode = #tpu.pipeline_mode<synchronous>, transform_indices = @transform_3, window_bounds = array<i64: 9, 8, 4>}, {pipeline_mode = #tpu.pipeline_mode<synchronous>, transform_indices = @transform_4, window_bounds = array<i64: 8, 128>}, {transform_indices = @transform_5, window_bounds = array<i64: 1, 12, 256>}]} {
    %c0 = arith.constant 0 : index
    %c0_0 = arith.constant 0 : index
    %c0_1 = arith.constant 0 : index
    %0 = vector.load %arg2[%c0, %c0_0, %c0_1] : memref<1x4x256xf32, #tpu.memory_space<vmem>>, vector<1x4x256xf32>
    %1 = vector.shape_cast %0 : vector<1x4x256xf32> to vector<4x256xf32>
    %c0_2 = arith.constant 0 : index
    %c0_3 = arith.constant 0 : index
    %c0_4 = arith.constant 0 : index
    %2 = vector.load %arg7[%c0_2, %c0_3, %c0_4] : memref<1x12x256xf32, #tpu.memory_space<vmem>>, vector<1x4x256xf32>
    %3 = vector.shape_cast %2 : vector<1x4x256xf32> to vector<4x256xf32>
    %4 = vector.shape_cast %1 : vector<4x256xf32> to vector<1x4x256xf32>
    tpu.vector_store %arg7[%c0_2, %c0_3, %c0_4], %4 {strides = array<i32>} : memref<1x12x256xf32, #tpu.memory_space<vmem>>, vector<1x4x256xf32>,
    %c0_5 = arith.constant 0 : index
    %c0_6 = arith.constant 0 : index
    %c112 = arith.constant 112 : index
    %5 = vector.load %arg3[%c0_5, %c0_6, %c112] : memref<1x4x128xf32, #tpu.memory_space<vmem>>, vector<1x4x16xf32>
    %6 = vector.shape_cast %5 : vector<1x4x16xf32> to vector<4x16xf32>
    %c0_i32 = arith.constant 0 : i32
    %7 = arith.cmpi sgt, %arg1, %c0_i32 : i32
    %8 = arith.extui %7 : i1 to i32
    %9 = arith.sitofp %8 : i32 to f32
    %10 = vector.broadcast %9 : f32 to vector<4x16xf32>
    %11 = arith.mulf %6, %10 : vector<4x16xf32>
    %c0_7 = arith.constant 0 : index
    %c0_8 = arith.constant 0 : index
    %c0_9 = arith.constant 0 : index
    %12 = vector.load %arg4[%c0_7, %c0_8, %c0_9] : memref<1x4x128xf32, #tpu.memory_space<vmem>>, vector<1x4x16xf32>
    %13 = vector.shape_cast %12 : vector<1x4x16xf32> to vector<4x16xf32>
    %c0_i32_10 = arith.constant 0 : i32
    %14 = arith.cmpi slt, %arg1, %c0_i32_10 : i32
    %15 = arith.extui %14 : i1 to i32
    %16 = arith.sitofp %15 : i32 to f32
    %17 = vector.broadcast %16 : f32 to vector<4x16xf32>
    %18 = arith.mulf %13, %17 : vector<4x16xf32>
    %cst = arith.constant 0.000000e+00 : f32
    %19 = vector.broadcast %cst : f32 to vector<4x16xf32>
    %20 = tpu.concatenate %19, %11, %1, %18, %19 in 1 : vector<4x16xf32>, vector<4x16xf32>, vector<4x256xf32>, vector<4x16xf32>, vector<4x16xf32> -> vector<4x320xf32>
    %21 = arith.truncf %20 : vector<4x320xf32> to vector<4x320xbf16>
    %22 = tpu.iota {dimensions = array<i32: 1>} : vector<1x256xi32>
    %c16_i32 = arith.constant 16 : i32
    %c0_i32_11 = arith.constant 0 : i32
    %23 = arith.cmpi eq, %c16_i32, %c0_i32_11 : i32
    %c1_i32 = arith.constant 1 : i32
    %24 = arith.select %23, %c1_i32, %c16_i32 : i32
    %25 = vector.broadcast %24 : i32 to vector<1x256xi32>
    %26 = arith.remsi %22, %25 : vector<1x256xi32>
    %c0_i32_12 = arith.constant 0 : i32
    %27 = vector.broadcast %c0_i32_12 : i32 to vector<1x256xi32>
    %28 = arith.cmpi ne, %26, %27 : vector<1x256xi32>
    %c0_i32_13 = arith.constant 0 : i32
    %29 = vector.broadcast %c0_i32_13 : i32 to vector<1x256xi32>
    %30 = arith.cmpi slt, %26, %29 : vector<1x256xi32>
    %c0_i32_14 = arith.constant 0 : i32
    %31 = arith.cmpi slt, %24, %c0_i32_14 : i32
    %32 = vector.broadcast %31 : i1 to vector<1x256xi1>
    %33 = vector.broadcast %32 : vector<1x256xi1> to vector<1x256xi1>
    %34 = arith.xori %30, %33 : vector<1x256xi1>
    %35 = arith.andi %34, %28 : vector<1x256xi1>
    %36 = vector.broadcast %24 : i32 to vector<1x256xi32>
    %37 = arith.addi %26, %36 : vector<1x256xi32>
    %38 = arith.select %35, %37, %26 : vector<1x256xi1>, vector<1x256xi32>
    %c-1_i32 = arith.constant -1 : i32
    %39 = vector.broadcast %c-1_i32 : i32 to vector<1x256xi32>
    %40 = arith.addi %38, %39 : vector<1x256xi32>
    %c0_i32_15 = arith.constant 0 : i32
    %41 = vector.broadcast %c0_i32_15 : i32 to vector<1x256xi32>
    %42 = arith.cmpi sge, %40, %41 : vector<1x256xi32>
    %c-1_i32_16 = arith.constant -1 : i32
    %43 = vector.broadcast %c-1_i32_16 : i32 to vector<1x256xi32>
    %44 = arith.addi %38, %43 : vector<1x256xi32>
    %c15_i32 = arith.constant 15 : i32
    %45 = vector.broadcast %c15_i32 : i32 to vector<1x256xi32>
    %46 = arith.cmpi sle, %44, %45 : vector<1x256xi32>
    %47 = arith.andi %42, %46 : vector<1x256xi1>
    %c1_i32_17 = arith.constant 1 : i32
    %48 = vector.broadcast %c1_i32_17 : i32 to vector<1x256xi32>
    %49 = arith.addi %38, %48 : vector<1x256xi32>
    %c0_i32_18 = arith.constant 0 : i32
    %50 = vector.broadcast %c0_i32_18 : i32 to vector<1x256xi32>
    %51 = arith.cmpi sge, %49, %50 : vector<1x256xi32>
    %c1_i32_19 = arith.constant 1 : i32
    %52 = vector.broadcast %c1_i32_19 : i32 to vector<1x256xi32>
    %53 = arith.addi %38, %52 : vector<1x256xi32>
    %c15_i32_20 = arith.constant 15 : i32
    %54 = vector.broadcast %c15_i32_20 : i32 to vector<1x256xi32>
    %55 = arith.cmpi sle, %53, %54 : vector<1x256xi32>
    %56 = arith.andi %51, %55 : vector<1x256xi1>
    %cst_21 = arith.constant 0.000000e+00 : f32
    %57 = vector.broadcast %cst_21 : f32 to vector<8x256xf32>
    %58 = vector.extract_strided_slice %21 {offsets = [0, 15], sizes = [4, 256], strides = [1, 1]} : vector<4x320xbf16> to vector<4x256xbf16>
    %cst_22 = arith.constant 0.000000e+00 : bf16
    %59 = vector.broadcast %cst_22 : bf16 to vector<4x256xbf16>
    %60 = vector.shape_cast %47 : vector<1x256xi1> to vector<1x256xi1>
    %61 = vector.broadcast %60 : vector<1x256xi1> to vector<4x256xi1>
    %62 = arith.select %61, %58, %59 : vector<4x256xi1>, vector<4x256xbf16>
    %c0_23 = arith.constant 0 : index
    %c0_24 = arith.constant 0 : index
    %c0_25 = arith.constant 0 : index
    %63 = vector.load %arg5[%c0_23, %c0_24, %c0_25] : memref<9x8x4xbf16, #tpu.memory_space<vmem>>, vector<1x8x4xbf16>
    %64 = vector.shape_cast %63 : vector<1x8x4xbf16> to vector<8x4xbf16>
    %cst_26 = arith.constant dense<0.000000e+00> : vector<8x256xf32>
    %65 = tpu.matmul %64, %62, %cst_26 {dimension_numbers = #tpu.dot_dimension_numbers<[1], [0], [0], [1], [0, 0, 1, 1], [], []>} : vector<8x4xbf16>, vector<4x256xbf16>, vector<8x256xf32> -> vector<8x256xf32>
    %66 = arith.addf %57, %65 : vector<8x256xf32>
    %67 = vector.extract_strided_slice %21 {offsets = [0, 16], sizes = [4, 256], strides = [1, 1]} : vector<4x320xbf16> to vector<4x256xbf16>
    %c1 = arith.constant 1 : index
    %c0_27 = arith.constant 0 : index
    %c0_28 = arith.constant 0 : index
    %68 = vector.load %arg5[%c1, %c0_27, %c0_28] : memref<9x8x4xbf16, #tpu.memory_space<vmem>>, vector<1x8x4xbf16>
    %69 = vector.shape_cast %68 : vector<1x8x4xbf16> to vector<8x4xbf16>
    %cst_29 = arith.constant dense<0.000000e+00> : vector<8x256xf32>
    %70 = tpu.matmul %69, %67, %cst_29 {dimension_numbers = #tpu.dot_dimension_numbers<[1], [0], [0], [1], [0, 0, 1, 1], [], []>} : vector<8x4xbf16>, vector<4x256xbf16>, vector<8x256xf32> -> vector<8x256xf32>
    %71 = arith.addf %66, %70 : vector<8x256xf32>
    %72 = vector.extract_strided_slice %21 {offsets = [0, 17], sizes = [4, 256], strides = [1, 1]} : vector<4x320xbf16> to vector<4x256xbf16>
    %cst_30 = arith.constant 0.000000e+00 : bf16
    %73 = vector.broadcast %cst_30 : bf16 to vector<4x256xbf16>
    %74 = vector.shape_cast %56 : vector<1x256xi1> to vector<1x256xi1>
    %75 = vector.broadcast %74 : vector<1x256xi1> to vector<4x256xi1>
    %76 = arith.select %75, %72, %73 : vector<4x256xi1>, vector<4x256xbf16>
    %c2 = arith.constant 2 : index
    %c0_31 = arith.constant 0 : index
    %c0_32 = arith.constant 0 : index
    %77 = vector.load %arg5[%c2, %c0_31, %c0_32] : memref<9x8x4xbf16, #tpu.memory_space<vmem>>, vector<1x8x4xbf16>
    %78 = vector.shape_cast %77 : vector<1x8x4xbf16> to vector<8x4xbf16>
    %cst_33 = arith.constant dense<0.000000e+00> : vector<8x256xf32>
    %79 = tpu.matmul %78, %76, %cst_33 {dimension_numbers = #tpu.dot_dimension_numbers<[1], [0], [0], [1], [0, 0, 1, 1], [], []>} : vector<8x4xbf16>, vector<4x256xbf16>, vector<8x256xf32> -> vector<8x256xf32>
    %80 = arith.addf %71, %79 : vector<8x256xf32>
    %81 = vector.extract_strided_slice %21 {offsets = [0, 31], sizes = [4, 256], strides = [1, 1]} : vector<4x320xbf16> to vector<4x256xbf16>
    %cst_34 = arith.constant 0.000000e+00 : bf16
    %82 = vector.broadcast %cst_34 : bf16 to vector<4x256xbf16>
    %83 = vector.shape_cast %47 : vector<1x256xi1> to vector<1x256xi1>
    %84 = vector.broadcast %83 : vector<1x256xi1> to vector<4x256xi1>
    %85 = arith.select %84, %81, %82 : vector<4x256xi1>, vector<4x256xbf16>
    %c3 = arith.constant 3 : index
    %c0_35 = arith.constant 0 : index
    %c0_36 = arith.constant 0 : index
    %86 = vector.load %arg5[%c3, %c0_35, %c0_36] : memref<9x8x4xbf16, #tpu.memory_space<vmem>>, vector<1x8x4xbf16>
    %87 = vector.shape_cast %86 : vector<1x8x4xbf16> to vector<8x4xbf16>
    %cst_37 = arith.constant dense<0.000000e+00> : vector<8x256xf32>
    %88 = tpu.matmul %87, %85, %cst_37 {dimension_numbers = #tpu.dot_dimension_numbers<[1], [0], [0], [1], [0, 0, 1, 1], [], []>} : vector<8x4xbf16>, vector<4x256xbf16>, vector<8x256xf32> -> vector<8x256xf32>
    %89 = arith.addf %80, %88 : vector<8x256xf32>
    %90 = vector.extract_strided_slice %21 {offsets = [0, 32], sizes = [4, 256], strides = [1, 1]} : vector<4x320xbf16> to vector<4x256xbf16>
    %c4 = arith.constant 4 : index
    %c0_38 = arith.constant 0 : index
    %c0_39 = arith.constant 0 : index
    %91 = vector.load %arg5[%c4, %c0_38, %c0_39] : memref<9x8x4xbf16, #tpu.memory_space<vmem>>, vector<1x8x4xbf16>
    %92 = vector.shape_cast %91 : vector<1x8x4xbf16> to vector<8x4xbf16>
    %cst_40 = arith.constant dense<0.000000e+00> : vector<8x256xf32>
    %93 = tpu.matmul %92, %90, %cst_40 {dimension_numbers = #tpu.dot_dimension_numbers<[1], [0], [0], [1], [0, 0, 1, 1], [], []>} : vector<8x4xbf16>, vector<4x256xbf16>, vector<8x256xf32> -> vector<8x256xf32>
    %94 = arith.addf %89, %93 : vector<8x256xf32>
    %95 = vector.extract_strided_slice %21 {offsets = [0, 33], sizes = [4, 256], strides = [1, 1]} : vector<4x320xbf16> to vector<4x256xbf16>
    %cst_41 = arith.constant 0.000000e+00 : bf16
    %96 = vector.broadcast %cst_41 : bf16 to vector<4x256xbf16>
    %97 = vector.shape_cast %56 : vector<1x256xi1> to vector<1x256xi1>
    %98 = vector.broadcast %97 : vector<1x256xi1> to vector<4x256xi1>
    %99 = arith.select %98, %95, %96 : vector<4x256xi1>, vector<4x256xbf16>
    %c5 = arith.constant 5 : index
    %c0_42 = arith.constant 0 : index
    %c0_43 = arith.constant 0 : index
    %100 = vector.load %arg5[%c5, %c0_42, %c0_43] : memref<9x8x4xbf16, #tpu.memory_space<vmem>>, vector<1x8x4xbf16>
    %101 = vector.shape_cast %100 : vector<1x8x4xbf16> to vector<8x4xbf16>
    %cst_44 = arith.constant dense<0.000000e+00> : vector<8x256xf32>
    %102 = tpu.matmul %101, %99, %cst_44 {dimension_numbers = #tpu.dot_dimension_numbers<[1], [0], [0], [1], [0, 0, 1, 1], [], []>} : vector<8x4xbf16>, vector<4x256xbf16>, vector<8x256xf32> -> vector<8x256xf32>
    %103 = arith.addf %94, %102 : vector<8x256xf32>
    %104 = vector.extract_strided_slice %21 {offsets = [0, 47], sizes = [4, 256], strides = [1, 1]} : vector<4x320xbf16> to vector<4x256xbf16>
    %cst_45 = arith.constant 0.000000e+00 : bf16
    %105 = vector.broadcast %cst_45 : bf16 to vector<4x256xbf16>
    %106 = vector.shape_cast %47 : vector<1x256xi1> to vector<1x256xi1>
    %107 = vector.broadcast %106 : vector<1x256xi1> to vector<4x256xi1>
    %108 = arith.select %107, %104, %105 : vector<4x256xi1>, vector<4x256xbf16>
    %c6 = arith.constant 6 : index
    %c0_46 = arith.constant 0 : index
    %c0_47 = arith.constant 0 : index
    %109 = vector.load %arg5[%c6, %c0_46, %c0_47] : memref<9x8x4xbf16, #tpu.memory_space<vmem>>, vector<1x8x4xbf16>
    %110 = vector.shape_cast %109 : vector<1x8x4xbf16> to vector<8x4xbf16>
    %cst_48 = arith.constant dense<0.000000e+00> : vector<8x256xf32>
    %111 = tpu.matmul %110, %108, %cst_48 {dimension_numbers = #tpu.dot_dimension_numbers<[1], [0], [0], [1], [0, 0, 1, 1], [], []>} : vector<8x4xbf16>, vector<4x256xbf16>, vector<8x256xf32> -> vector<8x256xf32>
    %112 = arith.addf %103, %111 : vector<8x256xf32>
    %113 = vector.extract_strided_slice %21 {offsets = [0, 48], sizes = [4, 256], strides = [1, 1]} : vector<4x320xbf16> to vector<4x256xbf16>
    %c7 = arith.constant 7 : index
    %c0_49 = arith.constant 0 : index
    %c0_50 = arith.constant 0 : index
    %114 = vector.load %arg5[%c7, %c0_49, %c0_50] : memref<9x8x4xbf16, #tpu.memory_space<vmem>>, vector<1x8x4xbf16>
    %115 = vector.shape_cast %114 : vector<1x8x4xbf16> to vector<8x4xbf16>
    %cst_51 = arith.constant dense<0.000000e+00> : vector<8x256xf32>
    %116 = tpu.matmul %115, %113, %cst_51 {dimension_numbers = #tpu.dot_dimension_numbers<[1], [0], [0], [1], [0, 0, 1, 1], [], []>} : vector<8x4xbf16>, vector<4x256xbf16>, vector<8x256xf32> -> vector<8x256xf32>
    %117 = arith.addf %112, %116 : vector<8x256xf32>
    %118 = vector.extract_strided_slice %21 {offsets = [0, 49], sizes = [4, 256], strides = [1, 1]} : vector<4x320xbf16> to vector<4x256xbf16>
    %cst_52 = arith.constant 0.000000e+00 : bf16
    %119 = vector.broadcast %cst_52 : bf16 to vector<4x256xbf16>
    %120 = vector.shape_cast %56 : vector<1x256xi1> to vector<1x256xi1>
    %121 = vector.broadcast %120 : vector<1x256xi1> to vector<4x256xi1>
    %122 = arith.select %121, %118, %119 : vector<4x256xi1>, vector<4x256xbf16>
    %c8 = arith.constant 8 : index
    %c0_53 = arith.constant 0 : index
    %c0_54 = arith.constant 0 : index
    %123 = vector.load %arg5[%c8, %c0_53, %c0_54] : memref<9x8x4xbf16, #tpu.memory_space<vmem>>, vector<1x8x4xbf16>
    %124 = vector.shape_cast %123 : vector<1x8x4xbf16> to vector<8x4xbf16>
    %cst_55 = arith.constant dense<0.000000e+00> : vector<8x256xf32>
    %125 = tpu.matmul %124, %122, %cst_55 {dimension_numbers = #tpu.dot_dimension_numbers<[1], [0], [0], [1], [0, 0, 1, 1], [], []>} : vector<8x4xbf16>, vector<4x256xbf16>, vector<8x256xf32> -> vector<8x256xf32>
    %126 = arith.addf %117, %125 : vector<8x256xf32>
    %c0_56 = arith.constant 0 : index
    %c0_57 = arith.constant 0 : index
    %127 = vector.load %arg6[%c0_56, %c0_57] : memref<8x128xf32, #tpu.memory_space<vmem>>, vector<8x1xf32>
    %128 = vector.broadcast %127 : vector<8x1xf32> to vector<8x256xf32>
    %129 = arith.addf %126, %128 : vector<8x256xf32>
    %cst_58 = arith.constant 0.000000e+00 : f32
    %130 = vector.broadcast %cst_58 : f32 to vector<8x256xf32>
    %131 = arith.maximumf %129, %130 : vector<8x256xf32>
    %c0_59 = arith.constant 0 : index
    %c4_60 = arith.constant 4 : index
    %c0_61 = arith.constant 0 : index
    %132 = vector.load %arg7[%c0_59, %c4_60, %c0_61] : memref<1x12x256xf32, #tpu.memory_space<vmem>>, vector<1x8x256xf32>
    %133 = vector.shape_cast %132 : vector<1x8x256xf32> to vector<8x256xf32>
    %134 = vector.shape_cast %131 : vector<8x256xf32> to vector<1x8x256xf32>
    tpu.vector_store %arg7[%c0_59, %c4_60, %c0_61], %134 {strides = array<i32>} : memref<1x12x256xf32, #tpu.memory_space<vmem>>, vector<1x8x256xf32>,
    return
  }
  func.func @transform_0(%arg0: i32, %arg1: i32) -> (i32, i32, i32) {
    %c0_i32 = arith.constant 0 : i32
    %c0_i32_0 = arith.constant 0 : i32
    return %arg0, %c0_i32, %arg1 : i32, i32, i32
  }
  func.func @transform_1(%arg0: i32, %arg1: i32) -> (i32, i32, i32) {
    %c2_i32 = arith.constant 2 : i32
    %0 = arith.muli %arg1, %c2_i32 : i32
    %c1_i32 = arith.constant 1 : i32
    %1 = arith.subi %0, %c1_i32 : i32
    %c0_i32 = arith.constant 0 : i32
    %2 = arith.maxsi %1, %c0_i32 : i32
    %c0_i32_0 = arith.constant 0 : i32
    %c0_i32_1 = arith.constant 0 : i32
    return %arg0, %c0_i32_0, %2 : i32, i32, i32
  }
  func.func @transform_2(%arg0: i32, %arg1: i32) -> (i32, i32, i32) {
    %c1_i32 = arith.constant 1 : i32
    %0 = arith.addi %arg1, %c1_i32 : i32
    %c2_i32 = arith.constant 2 : i32
    %1 = arith.muli %0, %c2_i32 : i32
    %c1_i32_0 = arith.constant 1 : i32
    %2 = arith.minsi %1, %c1_i32_0 : i32
    %c0_i32 = arith.constant 0 : i32
    %c0_i32_1 = arith.constant 0 : i32
    return %arg0, %c0_i32, %2 : i32, i32, i32
  }
  func.func @transform_3(%arg0: i32, %arg1: i32) -> (i32, i32, i32) {
    %c0_i32 = arith.constant 0 : i32
    %c0_i32_0 = arith.constant 0 : i32
    %c0_i32_1 = arith.constant 0 : i32
    %c0_i32_2 = arith.constant 0 : i32
    return %c0_i32, %c0_i32_0, %c0_i32_1 : i32, i32, i32
  }
  func.func @transform_4(%arg0: i32, %arg1: i32) -> (i32, i32) {
    %c0_i32 = arith.constant 0 : i32
    %c0_i32_0 = arith.constant 0 : i32
    %c0_i32_1 = arith.constant 0 : i32
    return %c0_i32, %c0_i32_0 : i32, i32
  }
  func.func @transform_5(%arg0: i32, %arg1: i32) -> (i32, i32, i32) {
    %c0_i32 = arith.constant 0 : i32
    %c0_i32_0 = arith.constant 0 : i32
    return %arg0, %c0_i32, %arg1 : i32, i32, i32
  }
}

</mosaic_0001>

<llo_original>
// kernel: tpu_custom_call.1
$region0: #{tpu_custom_call.1}
  #allocation0 [shape = 'u32[]', space=smem, size = 0x4, offset = 0x4, fixed_abs, tag = 'smem constant byte address 0x4 - core index']
  #allocation1 [shape = 'u32[144,128]{1,0:T(1,128)}', space=vmem, size = 0x12000, scoped, tag = 'internal scratch']
  %s0 = inlined_call_operand.vmem [shape: f32[2,4,256], index: 0, kind: input, shape index: {}]
  %s1 = inlined_call_operand.vmem [shape: f32[2,4,256], index: 1, kind: input, shape index: {}]
  %s2 = inlined_call_operand.vmem [shape: f32[2,4,256], index: 2, kind: input, shape index: {}]
  %s3 = inlined_call_operand.vmem [shape: bf16[9,8,4], index: 3, kind: input, shape index: {}]
  %s4 = inlined_call_operand.vmem [shape: f32[8,128], index: 4, kind: input, shape index: {}]
  %s5 = inlined_call_operand.vmem [shape: f32[2,12,256], index: 5, kind: output, shape index: {}]
  %s6 = sld [smem:[#allocation0]]
  $region53: #{tpu_custom_call.1} parent=0
    _
  %s8 = ssub.s32 1, %s6
  %s9 = scalar_select 0, %s8, %s6
  loop: start=0, step=1, limit=4
  $region2: #{tpu_custom_call.1} parent=0 // loop_pre_header
    _
  $region3: #{tpu_custom_call.1} parent=0 // loop_header
    %s11 = sphi 0, %s15
    %p12 = scmp.ge.s32.totalorder %s11, 4
    %s18 = sphi 0, %s30
    %s19 = sphi 0, %s26
    %s20 = sphi 0, %s18
    %s21 = sphi 0, %s19
    %s22 = sphi 0, %s20
    %s23 = sphi 0, %s21
    %s35 = sphi 0, %s37
    %s38 = sphi 0, %s35
    %s39 = sphi 0, %s38
    %s55 = sphi 0, %s39
    %s71 = sphi 0, %s73
    %s74 = sphi 0, %s71
    %s75 = sphi 0, %s74
    %s91 = sphi 0, %s75
    %s107 = sphi 0, %s109
    %s110 = sphi 0, %s107
    %s111 = sphi 0, %s110
    %s127 = sphi 0, %s111
    %s131 = sphi 0, %s131
    %s133 = sphi 0, %s131
    %s134 = sphi 0, %s133
    %s148 = sphi 0, %s134
    %s152 = sphi 0, %s152
    %s154 = sphi 0, %s152
    %s155 = sphi 0, %s154
    %s169 = sphi 0, %s155
    %s177 = sphi 0, %s179
    %s180 = sphi 0, %s177
    %s181 = sphi 0, %s180
    %s197 = sphi 0, %s181
  $region4: #{tpu_custom_call.1} parent=0 // loop_header_branch
    %14 = sbr.rel (%p12) target = $region8
  $region5: #{tpu_custom_call.1} parent=0 // loop_body
    %s16 = ssub.s32 %s11, 1
    %s17 = ssub.s32 %s11, 2
    %s24 = sadd.s32 1, %s19
    %p25 = scmp.ge.s32.totalorder %s24, 1
    %s26 = scalar_select %p25, 0, %s24
    %s27 = sadd.s32 1, %s18
    %s28 = scalar_select %p25, %s27, %s18
    %p29 = scmp.ge.s32.totalorder %s28, 2
    %s30 = scalar_select %p29, 0, %s28
    %s31 = ssub.s32 %s18, %s30
    %s32 = ssub.s32 %s19, %s26
    %s33 = sor.u32 %s31, %s32
    %p34 = scmp.eq.s32.totalorder %s33, 0
    %s36 = sadd.s32 %s35, 1
    %s37 = scalar_select %p34, %s35, %s36
    %p40 = pneg %p34
    %p41 = scmp.eq.s32.totalorder %s11, 1
    %p42 = por %p40, %p41
    %p43 = scmp.ne.s32.totalorder %s35, %s38
    %p44 = scmp.eq.s32.totalorder %s11, 0
    %p45 = por %p43, %p44
    %p46 = scmp.ne.s32.totalorder %s35, %s38
    %p47 = scmp.eq.s32.totalorder %s16, 1
    %p48 = por %p46, %p47
    %p49 = scmp.ne.s32.totalorder %s38, %s39
    %p50 = scmp.eq.s32.totalorder %s16, 0
    %p51 = por %p49, %p50
    %p52 = scmp.ne.s32.totalorder %s38, %s39
    %p53 = scmp.eq.s32.totalorder %s17, 1
    %p54 = por %p52, %p53
    %p56 = scmp.ne.s32.totalorder %s39, %s55
    %p57 = scmp.eq.s32.totalorder %s17, 0
    %p58 = por %p56, %p57
    %s59 = smul.u32 %s19, 2
    %s60 = ssub.s32 %s59, 1
    %p61 = scmp.gt.s32.totalorder %s60, 0
    %s62 = scalar_select %p61, %s60, 0
    %s63 = smul.u32 %s26, 2
    %s64 = ssub.s32 %s63, 1
    %p65 = scmp.gt.s32.totalorder %s64, 0
    %s66 = scalar_select %p65, %s64, 0
    %s67 = ssub.s32 %s18, %s30
    %s68 = ssub.s32 %s62, %s66
    %s69 = sor.u32 %s67, %s68
    %p70 = scmp.eq.s32.totalorder %s69, 0
    %s72 = sadd.s32 %s71, 1
    %s73 = scalar_select %p70, %s71, %s72
    %p76 = pneg %p70
    %p77 = scmp.eq.s32.totalorder %s11, 1
    %p78 = por %p76, %p77
    %p79 = scmp.ne.s32.totalorder %s71, %s74
    %p80 = scmp.eq.s32.totalorder %s11, 0
    %p81 = por %p79, %p80
    %p82 = scmp.ne.s32.totalorder %s71, %s74
    %p83 = scmp.eq.s32.totalorder %s16, 1
    %p84 = por %p82, %p83
    %p85 = scmp.ne.s32.totalorder %s74, %s75
    %p86 = scmp.eq.s32.totalorder %s16, 0
    %p87 = por %p85, %p86
    %p88 = scmp.ne.s32.totalorder %s74, %s75
    %p89 = scmp.eq.s32.totalorder %s17, 1
    %p90 = por %p88, %p89
    %p92 = scmp.ne.s32.totalorder %s75, %s91
    %p93 = scmp.eq.s32.totalorder %s17, 0
    %p94 = por %p92, %p93
    %s95 = sadd.s32 %s19, 1
    %s96 = smul.u32 %s95, 2
    %p97 = scmp.lt.s32.totalorder %s96, 1
    %s98 = scalar_select %p97, %s96, 1
    %s99 = sadd.s32 %s26, 1
    %s100 = smul.u32 %s99, 2
    %p101 = scmp.lt.s32.totalorder %s100, 1
    %s102 = scalar_select %p101, %s100, 1
    %s103 = ssub.s32 %s18, %s30
    %s104 = ssub.s32 %s98, %s102
    %s105 = sor.u32 %s103, %s104
    %p106 = scmp.eq.s32.totalorder %s105, 0
    %s108 = sadd.s32 %s107, 1
    %s109 = scalar_select %p106, %s107, %s108
    %p112 = pneg %p106
    %p113 = scmp.eq.s32.totalorder %s11, 1
    %p114 = por %p112, %p113
    %p115 = scmp.ne.s32.totalorder %s107, %s110
    %p116 = scmp.eq.s32.totalorder %s11, 0
    %p117 = por %p115, %p116
    %p118 = scmp.ne.s32.totalorder %s107, %s110
    %p119 = scmp.eq.s32.totalorder %s16, 1
    %p120 = por %p118, %p119
    %p121 = scmp.ne.s32.totalorder %s110, %s111
    %p122 = scmp.eq.s32.totalorder %s16, 0
    %p123 = por %p121, %p122
    %p124 = scmp.ne.s32.totalorder %s110, %s111
    %p125 = scmp.eq.s32.totalorder %s17, 1
    %p126 = por %p124, %p125
    %p128 = scmp.ne.s32.totalorder %s111, %s127
    %p129 = scmp.eq.s32.totalorder %s17, 0
    %p130 = por %p128, %p129
    %s132 = sadd.s32 %s131, 1
    %p135 = scmp.eq.s32.totalorder %s11, 1
    %p136 = scmp.ne.s32.totalorder %s131, %s133
    %p137 = scmp.eq.s32.totalorder %s11, 0
    %p138 = por %p136, %p137
    %p139 = scmp.ne.s32.totalorder %s131, %s133
    %p140 = scmp.eq.s32.totalorder %s16, 1
    %p141 = por %p139, %p140
    %p142 = scmp.ne.s32.totalorder %s133, %s134
    %p143 = scmp.eq.s32.totalorder %s16, 0
    %p144 = por %p142, %p143
    %p145 = scmp.ne.s32.totalorder %s133, %s134
    %p146 = scmp.eq.s32.totalorder %s17, 1
    %p147 = por %p145, %p146
    %p149 = scmp.ne.s32.totalorder %s134, %s148
    %p150 = scmp.eq.s32.totalorder %s17, 0
    %p151 = por %p149, %p150
    %s153 = sadd.s32 %s152, 1
    %p156 = scmp.eq.s32.totalorder %s11, 1
    %p157 = scmp.ne.s32.totalorder %s152, %s154
    %p158 = scmp.eq.s32.totalorder %s11, 0
    %p159 = por %p157, %p158
    %p160 = scmp.ne.s32.totalorder %s152, %s154
    %p161 = scmp.eq.s32.totalorder %s16, 1
    %p162 = por %p160, %p161
    %p163 = scmp.ne.s32.totalorder %s154, %s155
    %p164 = scmp.eq.s32.totalorder %s16, 0
    %p165 = por %p163, %p164
    %p166 = scmp.ne.s32.totalorder %s154, %s155
    %p167 = scmp.eq.s32.totalorder %s17, 1
    %p168 = por %p166, %p167
    %p170 = scmp.ne.s32.totalorder %s155, %s169
    %p171 = scmp.eq.s32.totalorder %s17, 0
    %p172 = por %p170, %p171
    %s173 = ssub.s32 %s18, %s30
    %s174 = ssub.s32 %s19, %s26
    %s175 = sor.u32 %s173, %s174
    %p176 = scmp.eq.s32.totalorder %s175, 0
    %s178 = sadd.s32 %s177, 1
    %s179 = scalar_select %p176, %s177, %s178
    %p182 = pneg %p176
    %p183 = scmp.eq.s32.totalorder %s11, 1
    %p184 = por %p182, %p183
    %p185 = scmp.ne.s32.totalorder %s177, %s180
    %p186 = scmp.eq.s32.totalorder %s11, 0
    %p187 = por %p185, %p186
    %p188 = scmp.ne.s32.totalorder %s177, %s180
    %p189 = scmp.eq.s32.totalorder %s16, 1
    %p190 = por %p188, %p189
    %p191 = scmp.ne.s32.totalorder %s180, %s181
    %p192 = scmp.eq.s32.totalorder %s16, 0
    %p193 = por %p191, %p192
    %p194 = scmp.ne.s32.totalorder %s180, %s181
    %p195 = scmp.eq.s32.totalorder %s17, 1
    %p196 = por %p194, %p195
    %p198 = scmp.ne.s32.totalorder %s181, %s197
    %p199 = scmp.eq.s32.totalorder %s17, 0
    %p200 = por %p198, %p199
    %p201 = scmp.le.s32.totalorder 1, %s11
    %p202 = scmp.lt.s32.totalorder %s11, 3
    %p203 = pnand %p201, %p202
    %p204 = pneg %p203
    // Predicated region
    $region9: #{tpu_custom_call.1} parent=5 // pred_check
      _
    $region10: #{tpu_custom_call.1} parent=5 // pred_check_branch
      %206 = sbr.rel (%p203) target = $region12
    $region11: #{tpu_custom_call.1} parent=5 // pred_region
      %s207 = ssub.s32 %s11, 1
      // Predicated region
      $region13: #{tpu_custom_call.1} parent=11 // pred_check
        %p208 = pneg %p144
      $region14: #{tpu_custom_call.1} parent=11 // pred_check_branch
        %210 = sbr.rel (%p208) target = $region16
      $region15: #{tpu_custom_call.1} parent=11 // pred_region
        _
      $region16: #{tpu_custom_call.1} parent=11 // pred_fallthru
        _
      // Predicated region
      $region17: #{tpu_custom_call.1} parent=11 // pred_check
        %p211 = pneg %p165
      $region18: #{tpu_custom_call.1} parent=11 // pred_check_branch
        %213 = sbr.rel (%p211) target = $region20
      $region19: #{tpu_custom_call.1} parent=11 // pred_region
        _
      $region20: #{tpu_custom_call.1} parent=11 // pred_fallthru
        _
    $region12: #{tpu_custom_call.1} parent=5 // pred_fallthru
      _
    %p214 = scmp.lt.s32.totalorder %s11, 2
    // Predicated region
    $region21: #{tpu_custom_call.1} parent=5 // pred_check
      %p215 = pneg %p214
    $region22: #{tpu_custom_call.1} parent=5 // pred_check_branch
      %217 = sbr.rel (%p215) target = $region24
    $region23: #{tpu_custom_call.1} parent=5 // pred_region
      // Predicated region
      $region25: #{tpu_custom_call.1} parent=23 // pred_check
        %p218 = pneg %p45
      $region26: #{tpu_custom_call.1} parent=23 // pred_check_branch
        %220 = sbr.rel (%p218) target = $region28
      $region27: #{tpu_custom_call.1} parent=23 // pred_region
        %s221 = smul.u32 2, %s19
        %p222 = scmp.lt.s32.totalorder %s18, 1
        %s223 = scalar_select %p222, %s18, 1
        %p224 = scmp.lt.s32.totalorder %s221, 1
        %s225 = scalar_select %p224, %s221, 1
        %s226 = smul.addr %s223, 2
        %s227 = sadd.s32 %s225, %s226
        %s228 = smul.addr %s227, 4
        %s229 = scalar_lea.vmem %s0, %s228
        %s230 = smul.u32 2, %s19
      $region28: #{tpu_custom_call.1} parent=23 // pred_fallthru
        _
      // Predicated region
      $region29: #{tpu_custom_call.1} parent=23 // pred_check
        %p231 = pneg %p81
      $region30: #{tpu_custom_call.1} parent=23 // pred_check_branch
        %233 = sbr.rel (%p231) target = $region32
      $region31: #{tpu_custom_call.1} parent=23 // pred_region
        %s234 = smul.u32 %s19, 2
        %s235 = ssub.s32 %s234, 1
        %p236 = scmp.gt.s32.totalorder %s235, 0
        %s237 = scalar_select %p236, %s235, 0
        %p238 = scmp.lt.s32.totalorder %s18, 1
        %s239 = scalar_select %p238, %s18, 1
        %p240 = scmp.lt.s32.totalorder %s237, 1
        %s241 = scalar_select %p240, %s237, 1
        %s242 = smul.addr %s239, 2
        %s243 = sadd.s32 %s241, %s242
        %s244 = smul.addr %s243, 4
        %s245 = scalar_lea.vmem %s1, %s244
        %s246 = smul.u32 %s19, 2
        %s247 = ssub.s32 %s246, 1
        %p248 = scmp.gt.s32.totalorder %s247, 0
        %s249 = scalar_select %p248, %s247, 0
      $region32: #{tpu_custom_call.1} parent=23 // pred_fallthru
        _
      // Predicated region
      $region33: #{tpu_custom_call.1} parent=23 // pred_check
        %p250 = pneg %p117
      $region34: #{tpu_custom_call.1} parent=23 // pred_check_branch
        %252 = sbr.rel (%p250) target = $region36
      $region35: #{tpu_custom_call.1} parent=23 // pred_region
        %s253 = sadd.s32 %s19, 1
        %s254 = smul.u32 %s253, 2
        %p255 = scmp.lt.s32.totalorder %s254, 1
        %s256 = scalar_select %p255, %s254, 1
        %p257 = scmp.lt.s32.totalorder %s18, 1
        %s258 = scalar_select %p257, %s18, 1
        %p259 = scmp.lt.s32.totalorder %s256, 1
        %s260 = scalar_select %p259, %s256, 1
        %s261 = smul.addr %s258, 2
        %s262 = sadd.s32 %s260, %s261
        %s263 = smul.addr %s262, 4
        %s264 = scalar_lea.vmem %s2, %s263
        %s265 = sadd.s32 %s19, 1
        %s266 = smul.u32 %s265, 2
        %p267 = scmp.lt.s32.totalorder %s266, 1
        %s268 = scalar_select %p267, %s266, 1
      $region36: #{tpu_custom_call.1} parent=23 // pred_fallthru
        _
    $region24: #{tpu_custom_call.1} parent=5 // pred_fallthru
      _
    %p269 = scmp.le.s32.totalorder 1, %s11
    %p270 = scmp.lt.s32.totalorder %s11, 3
    %p271 = pnand %p269, %p270
    %p272 = pneg %p271
    // Predicated region
    $region37: #{tpu_custom_call.1} parent=5 // pred_check
      _
    $region38: #{tpu_custom_call.1} parent=5 // pred_check_branch
      %274 = sbr.rel (%p271) target = $region40
    $region39: #{tpu_custom_call.1} parent=5 // pred_region
      %s275 = ssub.s32 %s11, 1
      %s276 = smul.u32 2, %s21
      %p277 = scmp.lt.s32.totalorder %s20, 1
      %s278 = scalar_select %p277, %s20, 1
      %p279 = scmp.lt.s32.totalorder %s276, 1
      %s280 = scalar_select %p279, %s276, 1
      %s281 = smul.addr %s278, 2
      %s282 = sadd.s32 %s280, %s281
      %s283 = smul.addr %s282, 4
      %s284 = scalar_lea.vmem %s0, %s283
      %p285 = pneg %p51
      %p286 = pneg %p48
      %s287 = smul.u32 %s21, 2
      %s288 = ssub.s32 %s287, 1
      %p289 = scmp.gt.s32.totalorder %s288, 0
      %s290 = scalar_select %p289, %s288, 0
      %p291 = scmp.lt.s32.totalorder %s20, 1
      %s292 = scalar_select %p291, %s20, 1
      %p293 = scmp.lt.s32.totalorder %s290, 1
      %s294 = scalar_select %p293, %s290, 1
      %s295 = smul.addr %s292, 2
      %s296 = sadd.s32 %s294, %s295
      %s297 = smul.addr %s296, 4
      %s298 = scalar_lea.vmem %s1, %s297
      %p299 = pneg %p87
      %p300 = pneg %p84
      %s301 = sadd.s32 %s21, 1
      %s302 = smul.u32 %s301, 2
      %p303 = scmp.lt.s32.totalorder %s302, 1
      %s304 = scalar_select %p303, %s302, 1
      %p305 = scmp.lt.s32.totalorder %s20, 1
      %s306 = scalar_select %p305, %s20, 1
      %p307 = scmp.lt.s32.totalorder %s304, 1
      %s308 = scalar_select %p307, %s304, 1
      %s309 = smul.addr %s306, 2
      %s310 = sadd.s32 %s308, %s309
      %s311 = smul.addr %s310, 4
      %s312 = scalar_lea.vmem %s2, %s311
      %p313 = pneg %p123
      %p314 = pneg %p120
      %p315 = pneg %p144
      %p316 = pneg %p141
      %p317 = pneg %p165
      %p318 = pneg %p162
      %p319 = pneg %p193
      %p320 = pneg %p190
      %s321 = smul.u32 2, %s21
      %p322 = scmp.lt.s32.totalorder %s20, 1
      %s323 = scalar_select %p322, %s20, 1
      %p324 = scmp.lt.s32.totalorder %s321, 1
      %s325 = scalar_select %p324, %s321, 1
      %s326 = smul.addr %s323, 4
      %s327 = sadd.s32 %s325, %s326
      %s328 = smul.addr %s327, 8
      %s329 = scalar_lea.vmem %s5, %s328
      %s330 = smul.u32 2, %s21
      %p331 = scmp.lt.s32.totalorder %s20, 1
      %s332 = scalar_select %p331, %s20, 1
      %p333 = scmp.lt.s32.totalorder %s330, 1
      %s334 = scalar_select %p333, %s330, 1
      %s335 = smul.addr %s332, 2
      %s336 = sadd.s32 %s334, %s335
      %s337 = smul.addr %s336, 4
      %s338 = scalar_lea.vmem %s0, %s337
      %s339 = smul.u32 2, %s21
      %s340 = smul.u32 %s21, 2
      %s341 = ssub.s32 %s340, 1
      %p342 = scmp.gt.s32.totalorder %s341, 0
      %s343 = scalar_select %p342, %s341, 0
      %p344 = scmp.lt.s32.totalorder %s20, 1
      %s345 = scalar_select %p344, %s20, 1
      %p346 = scmp.lt.s32.totalorder %s343, 1
      %s347 = scalar_select %p346, %s343, 1
      %s348 = smul.addr %s345, 2
      %s349 = sadd.s32 %s347, %s348
      %s350 = smul.addr %s349, 4
      %s351 = scalar_lea.vmem %s1, %s350
      %s352 = smul.u32 %s21, 2
      %s353 = ssub.s32 %s352, 1
      %p354 = scmp.gt.s32.totalorder %s353, 0
      %s355 = scalar_select %p354, %s353, 0
      %s356 = sadd.s32 %s21, 1
      %s357 = smul.u32 %s356, 2
      %p358 = scmp.lt.s32.totalorder %s357, 1
      %s359 = scalar_select %p358, %s357, 1
      %p360 = scmp.lt.s32.totalorder %s20, 1
      %s361 = scalar_select %p360, %s20, 1
      %p362 = scmp.lt.s32.totalorder %s359, 1
      %s363 = scalar_select %p362, %s359, 1
      %s364 = smul.addr %s361, 2
      %s365 = sadd.s32 %s363, %s364
      %s366 = smul.addr %s365, 4
      %s367 = scalar_lea.vmem %s2, %s366
      %s368 = sadd.s32 %s21, 1
      %s369 = smul.u32 %s368, 2
      %p370 = scmp.lt.s32.totalorder %s369, 1
      %s371 = scalar_select %p370, %s369, 1
      %s372 = smul.u32 2, %s21
      %p373 = scmp.lt.s32.totalorder %s20, 1
      %s374 = scalar_select %p373, %s20, 1
      %p375 = scmp.lt.s32.totalorder %s372, 1
      %s376 = scalar_select %p375, %s372, 1
      %s377 = smul.addr %s374, 4
      %s378 = sadd.s32 %s376, %s377
      %s379 = smul.addr %s378, 8
      %s380 = scalar_lea.vmem %s5, %s379
      %s381 = smul.u32 2, %s21
      %v385 = vld [vmem:[%s338] sm:$0xff]
      %v387 = vcombine.high %v385, %v385
      %389 = vst [vmem:[%s380] sm:$0xf] %v385
      %390 = vst [vmem:[%s380 + $0x8] sm:$0xf] %v387
      %v391 = vld [vmem:[%s351] sm:$0xf]
      %p392 = scmp.gt.s32.totalorder %s21, 0
      %s393 = scalar_select %p392, 1, 0
      %s394 = scvt.s32.f32 %s393
      %v395 = vstv %s394
      %v396 = vmul.f32 %v391, %v395
      %v397 = vld [vmem:[%s367] sm:$0xf]
      %p398 = scmp.lt.s32.totalorder %s21, 0
      %s399 = scalar_select %p398, 1, 0
      %s400 = scvt.s32.f32 %s399
      %v401 = vstv %s400
      %v402 = vmul.f32 %v397, %v401
      %404 = vrot.lane.b32.xlu0 %v396, 32
      %v405 = vpop.permute.xlu0 %404
      %407 = vrot.lane.b32.xlu0 %v385, 32
      %v408 = vpop.permute.xlu0 %407
      %409 = vrot.lane.b32.xlu0 %v387, 32
      %v410 = vpop.permute.xlu0 %409
      %vm411 = vcmask 261120
      %v412 = vsel %vm411, %v408, %v410
      %417 = vrot.lane.b32.xlu0 %v402, 32
      %v418 = vpop.permute.xlu0 %417
      %vm420 = vcmask 130048
      %v421 = vsel %vm420, 0.0, %v405
      %v422 = vsel %vm411, %v421, %v408
      %v423 = vsel %vm411, %v410, %v418
      %vm424 = vcmask 392192
      %v425 = vsel %vm424, %v423, 0.0
      %v426 = vpack.c.bf16 %v422, %v422
      %v427 = vpack.c.bf16 %v412, %v412
      %v428 = vpack.c.bf16 %v425, %v425
      %v429 = vlaneseq
      %v430 = vand.u32 %v429, 127
      %v431 = vadd.s32 %v430, 128
      %vm432 = vcmp.lt.s32.totalorder %v430, 0
      %v433 = vsub.s32 0, %v430
      %v434 = vsel %vm432, %v433, %v430
      %v435 = vshrl.u32 %v434, 4
      %v436 = vand.u32 %v434, 15
      %v437 = vsub.s32 0, %v436
      %v438 = vsel %vm432, %v437, %v436
      %vm439 = vcmp.lt.s32.totalorder %v431, 0
      %v440 = vsub.s32 0, %v431
      %v441 = vsel %vm439, %v440, %v431
      %v442 = vshrl.u32 %v441, 4
      %v443 = vand.u32 %v441, 15
      %v444 = vsub.s32 0, %v443
      %v445 = vsel %vm439, %v444, %v443
      %vm446 = vcmp.ne.s32.totalorder %v438, 0
      %vm447 = vcmp.ne.s32.totalorder %v445, 0
      %vm448 = vcmp.lt.s32.totalorder %v438, 0
      %vm449 = vcmp.lt.s32.totalorder %v445, 0
      %vm450 = vmand %vm448, %vm446
      %vm451 = vmand %vm449, %vm447
      %v452 = vadd.s32 %v438, 16
      %v453 = vadd.s32 %v445, 16
      %v454 = vsel %vm450, %v452, %v438
      %v455 = vsel %vm451, %v453, %v445
      %v456 = vadd.s32 %v454, 4294967295
      %v457 = vadd.s32 %v455, 4294967295
      %vm458 = vcmp.ge.s32.totalorder %v456, 0
      %vm459 = vcmp.ge.s32.totalorder %v457, 0
      %vm460 = vcmp.le.s32.totalorder %v456, 15
      %vm461 = vcmp.le.s32.totalorder %v457, 15
      %vm462 = vmand %vm458, %vm460
      %vm463 = vmand %vm459, %vm461
      %v464 = vadd.s32 %v454, 1
      %v465 = vadd.s32 %v455, 1
      %vm466 = vcmp.ge.s32.totalorder %v464, 0
      %vm467 = vcmp.ge.s32.totalorder %v465, 0
      %vm468 = vcmp.le.s32.totalorder %v464, 15
      %vm469 = vcmp.le.s32.totalorder %v465, 15
      %vm470 = vmand %vm466, %vm468
      %vm471 = vmand %vm467, %vm469
      %v472 = vsel %vm462, 1, 0
      %v473 = vsel %vm463, 1, 0
      %vm474 = vcmp.eq.s32.totalorder %v472, 1
      %vm475 = vcmp.eq.s32.totalorder %v473, 1
      %vm476 = vmpackc.low %vm475, %vm474
      %v477 = vsel %vm476, 65537, 0
      %v478 = vlaneseq
      %v479 = vshrl.u32 %v478, 7
      %v480 = vsub.s32 0, %v479
      %v481 = vrot.slane %v477, %v480
      %v482 = vlaneseq
      %v483 = vshrl.u32 %v482, 7
      %v484 = vsub.s32 4, %v483
      %v485 = vrot.slane %v477, %v484
      %486 = vrot.lane.b32.xlu0 %v481, 15
      %v487 = vpop.permute.xlu0 %486
      %488 = vrot.lane.b32.xlu0 %v485, 15
      %v489 = vpop.permute.xlu0 %488
      %vm490 = vcmask 121856
      %v491 = vsel %vm490, %v487, %v489
      %vm492 = vcmp.ne.s16.totalorder %v487, 0
      %vm493 = vcmp.ne.s16.totalorder %v491, 0
      %vm494 = vcmp.ne.s16.totalorder %v489, 0
      %v495 = vsel %vm492, %v426, 0
      %v496 = vsel %vm493, %v427, 0
      %v497 = vsel %vm494, %v428, 0
      %v498 = vld [vmem:[%s3] sm:$0xf]
      %s499 = scalar_lea.vmem %s3, 4
      %v500 = vld [vmem:[%s499] sm:$0xf]
      %504 = vrot.lane.b32.xlu0 %v426, 112
      %v505 = vpop.permute.xlu0 %504
      %506 = vrot.lane.b32.xlu0 %v427, 112
      %v507 = vpop.permute.xlu0 %506
      %508 = vrot.lane.b32.xlu0 %v428, 112
      %v509 = vpop.permute.xlu0 %508
      %vm510 = vcmask 916480
      %v511 = vsel %vm510, %v505, %v507
      %v512 = vsel %vm510, %v507, %v509
      %vm513 = vcmask 31744
      %v515 = vsel %vm513, %v500, 0
      %vm517 = vcmask 1041408
      %v519 = vsel %vm517, %v511, 0
      %v522 = vsel %vm517, %v512, 0
      %524 = vmatprep.subr.bf16.mxu0 %v522
      %525 = vmatpush1.bf16.msra.mxu0 %v519
      %526 = vmatprep.subr.bf16.mxu0 0
      %527 = vmatpush1.bf16.msra.mxu0 0
      %528 = vmatprep.subr.bf16.mxu0 0
      %529 = vmatpush1.bf16.msra.mxu0 0
      %530 = vmatprep.subr.bf16.mxu0 0
      %531 = vmatpush1.bf16.msra.mxu0 0
      %532 = vmatprep.subr.bf16.mxu0 0
      %533 = vmatpush1.bf16.msra.mxu0 0
      %534 = vmatprep.subr.bf16.mxu0 0
      %535 = vmatpush1.bf16.msra.mxu0 0
      %536 = vmatprep.subr.bf16.mxu0 0
      %537 = vmatpush1.bf16.msra.mxu0 0
      %538 = vmatprep.subr.bf16.mxu0 0
      %539 = vmatpush1.bf16.msra.mxu0 0
      %540 = vmatprep.subr.bf16.mxu0 0
      %541 = vmatpush1.bf16.msra.mxu0 0
      %542 = vmatprep.subr.bf16.mxu0 0
      %543 = vmatpush1.bf16.msra.mxu0 0
      %544 = vmatprep.subr.bf16.mxu0 0
      %545 = vmatpush1.bf16.msra.mxu0 0
      %546 = vmatprep.subr.bf16.mxu0 0
      %547 = vmatpush1.bf16.msra.mxu0 0
      %548 = vmatprep.subr.bf16.mxu0 0
      %549 = vmatpush1.bf16.msra.mxu0 0
      %550 = vmatprep.subr.bf16.mxu0 0
      %551 = vmatpush1.bf16.msra.mxu0 0
      %552 = vmatprep.subr.bf16.mxu0 0
      %553 = vmatpush1.bf16.msra.mxu0 0
      %554 = vmatprep.subr.bf16.mxu0 0
      %555 = vmatpush1.bf16.msra.mxu0 0
      %556 = vmatprep.mubr.bf16.mxu0 0
      %557 = vmatmul.mubr.bf16.gmra.mrb[0].mxu0 %v515
      %v558 = vpop.f32.mrb[0].mxu0
      %v559 = vadd.f32 0.0, %v558
      %v560 = vpop.f32.mrb[0].mxu0
      %v561 = vadd.f32 0.0, %v560
      %v562 = vpop.f32.mrb[0].mxu0
      %v563 = vpop.f32.mrb[0].mxu0
      %564 = vdwg.mxu0
      %568 = vrot.lane.b32.xlu0 %v495, 113
      %v569 = vpop.permute.xlu0 %568
      %570 = vrot.lane.b32.xlu0 %v496, 113
      %v571 = vpop.permute.xlu0 %570
      %572 = vrot.lane.b32.xlu0 %v497, 113
      %v573 = vpop.permute.xlu0 %572
      %vm574 = vcmask 924672
      %v575 = vsel %vm574, %v569, %v571
      %v576 = vsel %vm574, %v571, %v573
      %v578 = vsel %vm513, %v498, 0
      %v581 = vsel %vm517, %v575, 0
      %v584 = vsel %vm517, %v576, 0
      %586 = vmatprep.subr.bf16.mxu0 %v584
      %587 = vmatpush1.bf16.msra.mxu0 %v581
      %588 = vmatprep.subr.bf16.mxu0 0
      %589 = vmatpush1.bf16.msra.mxu0 0
      %590 = vmatprep.subr.bf16.mxu0 0
      %591 = vmatpush1.bf16.msra.mxu0 0
      %592 = vmatprep.subr.bf16.mxu0 0
      %593 = vmatpush1.bf16.msra.mxu0 0
      %594 = vmatprep.subr.bf16.mxu0 0
      %595 = vmatpush1.bf16.msra.mxu0 0
      %596 = vmatprep.subr.bf16.mxu0 0
      %597 = vmatpush1.bf16.msra.mxu0 0
      %598 = vmatprep.subr.bf16.mxu0 0
      %599 = vmatpush1.bf16.msra.mxu0 0
      %600 = vmatprep.subr.bf16.mxu0 0
      %601 = vmatpush1.bf16.msra.mxu0 0
      %602 = vmatprep.subr.bf16.mxu0 0
      %603 = vmatpush1.bf16.msra.mxu0 0
      %604 = vmatprep.subr.bf16.mxu0 0
      %605 = vmatpush1.bf16.msra.mxu0 0
      %606 = vmatprep.subr.bf16.mxu0 0
      %607 = vmatpush1.bf16.msra.mxu0 0
      %608 = vmatprep.subr.bf16.mxu0 0
      %609 = vmatpush1.bf16.msra.mxu0 0
      %610 = vmatprep.subr.bf16.mxu0 0
      %611 = vmatpush1.bf16.msra.mxu0 0
      %612 = vmatprep.subr.bf16.mxu0 0
      %613 = vmatpush1.bf16.msra.mxu0 0
      %614 = vmatprep.subr.bf16.mxu0 0
      %615 = vmatpush1.bf16.msra.mxu0 0
      %616 = vmatprep.subr.bf16.mxu0 0
      %617 = vmatpush1.bf16.msra.mxu0 0
      %618 = vmatprep.mubr.bf16.mxu0 0
      %619 = vmatmul.mubr.bf16.gmra.mrb[0].mxu0 %v578
      %v620 = vpop.f32.mrb[0].mxu0
      %v621 = vadd.f32 %v559, %v620
      %v622 = vpop.f32.mrb[0].mxu0
      %v623 = vadd.f32 %v561, %v622
      %v624 = vpop.f32.mrb[0].mxu0
      %v625 = vpop.f32.mrb[0].mxu0
      %626 = vdwg.mxu0
      %v627 = vsel %vm470, 1, 0
      %v628 = vsel %vm471, 1, 0
      %vm629 = vcmp.eq.s32.totalorder %v627, 1
      %vm630 = vcmp.eq.s32.totalorder %v628, 1
      %vm631 = vmpackc.low %vm630, %vm629
      %v632 = vsel %vm631, 65537, 0
      %v633 = vlaneseq
      %v634 = vshrl.u32 %v633, 7
      %v635 = vsub.s32 0, %v634
      %v636 = vrot.slane %v632, %v635
      %v637 = vlaneseq
      %v638 = vshrl.u32 %v637, 7
      %v639 = vsub.s32 4, %v638
      %v640 = vrot.slane %v632, %v639
      %641 = vrot.lane.b32.xlu0 %v636, 17
      %v642 = vpop.permute.xlu0 %641
      %643 = vrot.lane.b32.xlu0 %v640, 17
      %v644 = vpop.permute.xlu0 %643
      %vm645 = vcmask 138240
      %v646 = vsel %vm645, %v642, %v644
      %vm647 = vcmp.ne.s16.totalorder %v642, 0
      %vm648 = vcmp.ne.s16.totalorder %v646, 0
      %vm649 = vcmp.ne.s16.totalorder %v644, 0
      %v650 = vsel %vm647, %v426, 0
      %v651 = vsel %vm648, %v427, 0
      %v652 = vsel %vm649, %v428, 0
      %s653 = scalar_lea.vmem %s3, 8
      %v654 = vld [vmem:[%s653] sm:$0xf]
      %658 = vrot.lane.b32.xlu0 %v650, 111
      %v659 = vpop.permute.xlu0 %658
      %660 = vrot.lane.b32.xlu0 %v651, 111
      %v661 = vpop.permute.xlu0 %660
      %662 = vrot.lane.b32.xlu0 %v652, 111
      %v663 = vpop.permute.xlu0 %662
      %vm664 = vcmask 908288
      %v665 = vsel %vm664, %v659, %v661
      %v666 = vsel %vm664, %v661, %v663
      %v668 = vsel %vm513, %v654, 0
      %v671 = vsel %vm517, %v665, 0
      %v674 = vsel %vm517, %v666, 0
      %676 = vmatprep.subr.bf16.mxu0 %v674
      %677 = vmatpush1.bf16.msra.mxu0 %v671
      %678 = vmatprep.subr.bf16.mxu0 0
      %679 = vmatpush1.bf16.msra.mxu0 0
      %680 = vmatprep.subr.bf16.mxu0 0
      %681 = vmatpush1.bf16.msra.mxu0 0
      %682 = vmatprep.subr.bf16.mxu0 0
      %683 = vmatpush1.bf16.msra.mxu0 0
      %684 = vmatprep.subr.bf16.mxu0 0
      %685 = vmatpush1.bf16.msra.mxu0 0
      %686 = vmatprep.subr.bf16.mxu0 0
      %687 = vmatpush1.bf16.msra.mxu0 0
      %688 = vmatprep.subr.bf16.mxu0 0
      %689 = vmatpush1.bf16.msra.mxu0 0
      %690 = vmatprep.subr.bf16.mxu0 0
      %691 = vmatpush1.bf16.msra.mxu0 0
      %692 = vmatprep.subr.bf16.mxu0 0
      %693 = vmatpush1.bf16.msra.mxu0 0
      %694 = vmatprep.subr.bf16.mxu0 0
      %695 = vmatpush1.bf16.msra.mxu0 0
      %696 = vmatprep.subr.bf16.mxu0 0
      %697 = vmatpush1.bf16.msra.mxu0 0
      %698 = vmatprep.subr.bf16.mxu0 0
      %699 = vmatpush1.bf16.msra.mxu0 0
      %700 = vmatprep.subr.bf16.mxu0 0
      %701 = vmatpush1.bf16.msra.mxu0 0
      %702 = vmatprep.subr.bf16.mxu0 0
      %703 = vmatpush1.bf16.msra.mxu0 0
      %704 = vmatprep.subr.bf16.mxu0 0
      %705 = vmatpush1.bf16.msra.mxu0 0
      %706 = vmatprep.subr.bf16.mxu0 0
      %707 = vmatpush1.bf16.msra.mxu0 0
      %708 = vmatprep.mubr.bf16.mxu0 0
      %709 = vmatmul.mubr.bf16.gmra.mrb[0].mxu0 %v668
      %v710 = vpop.f32.mrb[0].mxu0
      %v711 = vadd.f32 0.0, %v710
      %v712 = vpop.f32.mrb[0].mxu0
      %v713 = vadd.f32 0.0, %v712
      %v714 = vpop.f32.mrb[0].mxu0
      %v715 = vpop.f32.mrb[0].mxu0
      %716 = vdwg.mxu0
      %v717 = vadd.f32 %v621, %v711
      %v718 = vadd.f32 %v623, %v713
      %719 = vrot.lane.b32.xlu0 %v481, 31
      %v720 = vpop.permute.xlu0 %719
      %721 = vrot.lane.b32.xlu0 %v485, 31
      %v722 = vpop.permute.xlu0 %721
      %vm723 = vcmask 252928
      %v724 = vsel %vm723, %v720, %v722
      %vm725 = vcmp.ne.s16.totalorder %v720, 0
      %vm726 = vcmp.ne.s16.totalorder %v724, 0
      %vm727 = vcmp.ne.s16.totalorder %v722, 0
      %v728 = vsel %vm725, %v426, 0
      %v729 = vsel %vm726, %v427, 0
      %v730 = vsel %vm727, %v428, 0
      %s731 = scalar_lea.vmem %s3, 12
      %v732 = vld [vmem:[%s731] sm:$0xf]
      %736 = vrot.lane.b32.xlu0 %v728, 97
      %v737 = vpop.permute.xlu0 %736
      %738 = vrot.lane.b32.xlu0 %v729, 97
      %v739 = vpop.permute.xlu0 %738
      %740 = vrot.lane.b32.xlu0 %v730, 97
      %v741 = vpop.permute.xlu0 %740
      %vm742 = vcmask 793600
      %v743 = vsel %vm742, %v737, %v739
      %v744 = vsel %vm742, %v739, %v741
      %v746 = vsel %vm513, %v732, 0
      %v749 = vsel %vm517, %v743, 0
      %v752 = vsel %vm517, %v744, 0
      %754 = vmatprep.subr.bf16.mxu0 %v752
      %755 = vmatpush1.bf16.msra.mxu0 %v749
      %756 = vmatprep.subr.bf16.mxu0 0
      %757 = vmatpush1.bf16.msra.mxu0 0
      %758 = vmatprep.subr.bf16.mxu0 0
      %759 = vmatpush1.bf16.msra.mxu0 0
      %760 = vmatprep.subr.bf16.mxu0 0
      %761 = vmatpush1.bf16.msra.mxu0 0
      %762 = vmatprep.subr.bf16.mxu0 0
      %763 = vmatpush1.bf16.msra.mxu0 0
      %764 = vmatprep.subr.bf16.mxu0 0
      %765 = vmatpush1.bf16.msra.mxu0 0
      %766 = vmatprep.subr.bf16.mxu0 0
      %767 = vmatpush1.bf16.msra.mxu0 0
      %768 = vmatprep.subr.bf16.mxu0 0
      %769 = vmatpush1.bf16.msra.mxu0 0
      %770 = vmatprep.subr.bf16.mxu0 0
      %771 = vmatpush1.bf16.msra.mxu0 0
      %772 = vmatprep.subr.bf16.mxu0 0
      %773 = vmatpush1.bf16.msra.mxu0 0
      %774 = vmatprep.subr.bf16.mxu0 0
      %775 = vmatpush1.bf16.msra.mxu0 0
      %776 = vmatprep.subr.bf16.mxu0 0
      %777 = vmatpush1.bf16.msra.mxu0 0
      %778 = vmatprep.subr.bf16.mxu0 0
      %779 = vmatpush1.bf16.msra.mxu0 0
      %780 = vmatprep.subr.bf16.mxu0 0
      %781 = vmatpush1.bf16.msra.mxu0 0
      %782 = vmatprep.subr.bf16.mxu0 0
      %783 = vmatpush1.bf16.msra.mxu0 0
      %784 = vmatprep.subr.bf16.mxu0 0
      %785 = vmatpush1.bf16.msra.mxu0 0
      %786 = vmatprep.mubr.bf16.mxu0 0
      %787 = vmatmul.mubr.bf16.gmra.mrb[0].mxu0 %v746
      %v788 = vpop.f32.mrb[0].mxu0
      %v789 = vadd.f32 0.0, %v788
      %v790 = vpop.f32.mrb[0].mxu0
      %v791 = vadd.f32 0.0, %v790
      %v792 = vpop.f32.mrb[0].mxu0
      %v793 = vpop.f32.mrb[0].mxu0
      %794 = vdwg.mxu0
      %v795 = vadd.f32 %v717, %v789
      %v796 = vadd.f32 %v718, %v791
      %s797 = scalar_lea.vmem %s3, 16
      %v798 = vld [vmem:[%s797] sm:$0xf]
      %799 = vrot.lane.b32.xlu0 %v426, 96
      %v800 = vpop.permute.xlu0 %799
      %801 = vrot.lane.b32.xlu0 %v427, 96
      %v802 = vpop.permute.xlu0 %801
      %803 = vrot.lane.b32.xlu0 %v428, 96
      %v804 = vpop.permute.xlu0 %803
      %vm805 = vcmask 785408
      %v806 = vsel %vm805, %v800, %v802
      %v807 = vsel %vm805, %v802, %v804
      %v809 = vsel %vm513, %v798, 0
      %v812 = vsel %vm517, %v806, 0
      %v815 = vsel %vm517, %v807, 0
      %817 = vmatprep.subr.bf16.mxu0 %v815
      %818 = vmatpush1.bf16.msra.mxu0 %v812
      %819 = vmatprep.subr.bf16.mxu0 0
      %820 = vmatpush1.bf16.msra.mxu0 0
      %821 = vmatprep.subr.bf16.mxu0 0
      %822 = vmatpush1.bf16.msra.mxu0 0
      %823 = vmatprep.subr.bf16.mxu0 0
      %824 = vmatpush1.bf16.msra.mxu0 0
      %825 = vmatprep.subr.bf16.mxu0 0
      %826 = vmatpush1.bf16.msra.mxu0 0
      %827 = vmatprep.subr.bf16.mxu0 0
      %828 = vmatpush1.bf16.msra.mxu0 0
      %829 = vmatprep.subr.bf16.mxu0 0
      %830 = vmatpush1.bf16.msra.mxu0 0
      %831 = vmatprep.subr.bf16.mxu0 0
      %832 = vmatpush1.bf16.msra.mxu0 0
      %833 = vmatprep.subr.bf16.mxu0 0
      %834 = vmatpush1.bf16.msra.mxu0 0
      %835 = vmatprep.subr.bf16.mxu0 0
      %836 = vmatpush1.bf16.msra.mxu0 0
      %837 = vmatprep.subr.bf16.mxu0 0
      %838 = vmatpush1.bf16.msra.mxu0 0
      %839 = vmatprep.subr.bf16.mxu0 0
      %840 = vmatpush1.bf16.msra.mxu0 0
      %841 = vmatprep.subr.bf16.mxu0 0
      %842 = vmatpush1.bf16.msra.mxu0 0
      %843 = vmatprep.subr.bf16.mxu0 0
      %844 = vmatpush1.bf16.msra.mxu0 0
      %845 = vmatprep.subr.bf16.mxu0 0
      %846 = vmatpush1.bf16.msra.mxu0 0
      %847 = vmatprep.subr.bf16.mxu0 0
      %848 = vmatpush1.bf16.msra.mxu0 0
      %849 = vmatprep.mubr.bf16.mxu0 0
      %850 = vmatmul.mubr.bf16.gmra.mrb[0].mxu0 %v809
      %v851 = vpop.f32.mrb[0].mxu0
      %v852 = vadd.f32 0.0, %v851
      %v853 = vpop.f32.mrb[0].mxu0
      %v854 = vadd.f32 0.0, %v853
      %v855 = vpop.f32.mrb[0].mxu0
      %v856 = vpop.f32.mrb[0].mxu0
      %857 = vdwg.mxu0
      %v858 = vadd.f32 %v795, %v852
      %v859 = vadd.f32 %v796, %v854
      %860 = vrot.lane.b32.xlu0 %v636, 33
      %v861 = vpop.permute.xlu0 %860
      %862 = vrot.lane.b32.xlu0 %v640, 33
      %v863 = vpop.permute.xlu0 %862
      %vm864 = vcmask 269312
      %v865 = vsel %vm864, %v861, %v863
      %vm866 = vcmp.ne.s16.totalorder %v861, 0
      %vm867 = vcmp.ne.s16.totalorder %v865, 0
      %vm868 = vcmp.ne.s16.totalorder %v863, 0
      %v869 = vsel %vm866, %v426, 0
      %v870 = vsel %vm867, %v427, 0
      %v871 = vsel %vm868, %v428, 0
      %s872 = scalar_lea.vmem %s3, 20
      %v873 = vld [vmem:[%s872] sm:$0xf]
      %877 = vrot.lane.b32.xlu0 %v869, 95
      %v878 = vpop.permute.xlu0 %877
      %879 = vrot.lane.b32.xlu0 %v870, 95
      %v880 = vpop.permute.xlu0 %879
      %881 = vrot.lane.b32.xlu0 %v871, 95
      %v882 = vpop.permute.xlu0 %881
      %vm883 = vcmask 777216
      %v884 = vsel %vm883, %v878, %v880
      %v885 = vsel %vm883, %v880, %v882
      %v887 = vsel %vm513, %v873, 0
      %v890 = vsel %vm517, %v884, 0
      %v893 = vsel %vm517, %v885, 0
      %895 = vmatprep.subr.bf16.mxu0 %v893
      %896 = vmatpush1.bf16.msra.mxu0 %v890
      %897 = vmatprep.subr.bf16.mxu0 0
      %898 = vmatpush1.bf16.msra.mxu0 0
      %899 = vmatprep.subr.bf16.mxu0 0
      %900 = vmatpush1.bf16.msra.mxu0 0
      %901 = vmatprep.subr.bf16.mxu0 0
      %902 = vmatpush1.bf16.msra.mxu0 0
      %903 = vmatprep.subr.bf16.mxu0 0
      %904 = vmatpush1.bf16.msra.mxu0 0
      %905 = vmatprep.subr.bf16.mxu0 0
      %906 = vmatpush1.bf16.msra.mxu0 0
      %907 = vmatprep.subr.bf16.mxu0 0
      %908 = vmatpush1.bf16.msra.mxu0 0
      %909 = vmatprep.subr.bf16.mxu0 0
      %910 = vmatpush1.bf16.msra.mxu0 0
      %911 = vmatprep.subr.bf16.mxu0 0
      %912 = vmatpush1.bf16.msra.mxu0 0
      %913 = vmatprep.subr.bf16.mxu0 0
      %914 = vmatpush1.bf16.msra.mxu0 0
      %915 = vmatprep.subr.bf16.mxu0 0
      %916 = vmatpush1.bf16.msra.mxu0 0
      %917 = vmatprep.subr.bf16.mxu0 0
      %918 = vmatpush1.bf16.msra.mxu0 0
      %919 = vmatprep.subr.bf16.mxu0 0
      %920 = vmatpush1.bf16.msra.mxu0 0
      %921 = vmatprep.subr.bf16.mxu0 0
      %922 = vmatpush1.bf16.msra.mxu0 0
      %923 = vmatprep.subr.bf16.mxu0 0
      %924 = vmatpush1.bf16.msra.mxu0 0
      %925 = vmatprep.subr.bf16.mxu0 0
      %926 = vmatpush1.bf16.msra.mxu0 0
      %927 = vmatprep.mubr.bf16.mxu0 0
      %928 = vmatmul.mubr.bf16.gmra.mrb[0].mxu0 %v887
      %v929 = vpop.f32.mrb[0].mxu0
      %v930 = vadd.f32 0.0, %v929
      %v931 = vpop.f32.mrb[0].mxu0
      %v932 = vadd.f32 0.0, %v931
      %v933 = vpop.f32.mrb[0].mxu0
      %v934 = vpop.f32.mrb[0].mxu0
      %935 = vdwg.mxu0
      %v936 = vadd.f32 %v858, %v930
      %v937 = vadd.f32 %v859, %v932
      %938 = vrot.lane.b32.xlu0 %v481, 47
      %v939 = vpop.permute.xlu0 %938
      %940 = vrot.lane.b32.xlu0 %v485, 47
      %v941 = vpop.permute.xlu0 %940
      %vm942 = vcmask 384000
      %v943 = vsel %vm942, %v939, %v941
      %vm944 = vcmp.ne.s16.totalorder %v939, 0
      %vm945 = vcmp.ne.s16.totalorder %v943, 0
      %vm946 = vcmp.ne.s16.totalorder %v941, 0
      %v947 = vsel %vm944, %v426, 0
      %v948 = vsel %vm945, %v427, 0
      %v949 = vsel %vm946, %v428, 0
      %s950 = scalar_lea.vmem %s3, 24
      %v951 = vld [vmem:[%s950] sm:$0xf]
      %955 = vrot.lane.b32.xlu0 %v947, 81
      %v956 = vpop.permute.xlu0 %955
      %957 = vrot.lane.b32.xlu0 %v948, 81
      %v958 = vpop.permute.xlu0 %957
      %959 = vrot.lane.b32.xlu0 %v949, 81
      %v960 = vpop.permute.xlu0 %959
      %vm961 = vcmask 662528
      %v962 = vsel %vm961, %v956, %v958
      %v963 = vsel %vm961, %v958, %v960
      %v965 = vsel %vm513, %v951, 0
      %v968 = vsel %vm517, %v962, 0
      %v971 = vsel %vm517, %v963, 0
      %973 = vmatprep.subr.bf16.mxu0 %v971
      %974 = vmatpush1.bf16.msra.mxu0 %v968
      %975 = vmatprep.subr.bf16.mxu0 0
      %976 = vmatpush1.bf16.msra.mxu0 0
      %977 = vmatprep.subr.bf16.mxu0 0
      %978 = vmatpush1.bf16.msra.mxu0 0
      %979 = vmatprep.subr.bf16.mxu0 0
      %980 = vmatpush1.bf16.msra.mxu0 0
      %981 = vmatprep.subr.bf16.mxu0 0
      %982 = vmatpush1.bf16.msra.mxu0 0
      %983 = vmatprep.subr.bf16.mxu0 0
      %984 = vmatpush1.bf16.msra.mxu0 0
      %985 = vmatprep.subr.bf16.mxu0 0
      %986 = vmatpush1.bf16.msra.mxu0 0
      %987 = vmatprep.subr.bf16.mxu0 0
      %988 = vmatpush1.bf16.msra.mxu0 0
      %989 = vmatprep.subr.bf16.mxu0 0
      %990 = vmatpush1.bf16.msra.mxu0 0
      %991 = vmatprep.subr.bf16.mxu0 0
      %992 = vmatpush1.bf16.msra.mxu0 0
      %993 = vmatprep.subr.bf16.mxu0 0
      %994 = vmatpush1.bf16.msra.mxu0 0
      %995 = vmatprep.subr.bf16.mxu0 0
      %996 = vmatpush1.bf16.msra.mxu0 0
      %997 = vmatprep.subr.bf16.mxu0 0
      %998 = vmatpush1.bf16.msra.mxu0 0
      %999 = vmatprep.subr.bf16.mxu0 0
      %1000 = vmatpush1.bf16.msra.mxu0 0
      %1001 = vmatprep.subr.bf16.mxu0 0
      %1002 = vmatpush1.bf16.msra.mxu0 0
      %1003 = vmatprep.subr.bf16.mxu0 0
      %1004 = vmatpush1.bf16.msra.mxu0 0
      %1005 = vmatprep.mubr.bf16.mxu0 0
      %1006 = vmatmul.mubr.bf16.gmra.mrb[0].mxu0 %v965
      %v1007 = vpop.f32.mrb[0].mxu0
      %v1008 = vadd.f32 0.0, %v1007
      %v1009 = vpop.f32.mrb[0].mxu0
      %v1010 = vadd.f32 0.0, %v1009
      %v1011 = vpop.f32.mrb[0].mxu0
      %v1012 = vpop.f32.mrb[0].mxu0
      %1013 = vdwg.mxu0
      %v1014 = vadd.f32 %v936, %v1008
      %v1015 = vadd.f32 %v937, %v1010
      %s1016 = scalar_lea.vmem %s3, 28
      %v1017 = vld [vmem:[%s1016] sm:$0xf]
      %1018 = vrot.lane.b32.xlu0 %v426, 80
      %v1019 = vpop.permute.xlu0 %1018
      %1020 = vrot.lane.b32.xlu0 %v427, 80
      %v1021 = vpop.permute.xlu0 %1020
      %1022 = vrot.lane.b32.xlu0 %v428, 80
      %v1023 = vpop.permute.xlu0 %1022
      %vm1024 = vcmask 654336
      %v1025 = vsel %vm1024, %v1019, %v1021
      %v1026 = vsel %vm1024, %v1021, %v1023
      %v1028 = vsel %vm513, %v1017, 0
      %v1031 = vsel %vm517, %v1025, 0
      %v1034 = vsel %vm517, %v1026, 0
      %1036 = vmatprep.subr.bf16.mxu0 %v1034
      %1037 = vmatpush1.bf16.msra.mxu0 %v1031
      %1038 = vmatprep.subr.bf16.mxu0 0
      %1039 = vmatpush1.bf16.msra.mxu0 0
      %1040 = vmatprep.subr.bf16.mxu0 0
      %1041 = vmatpush1.bf16.msra.mxu0 0
      %1042 = vmatprep.subr.bf16.mxu0 0
      %1043 = vmatpush1.bf16.msra.mxu0 0
      %1044 = vmatprep.subr.bf16.mxu0 0
      %1045 = vmatpush1.bf16.msra.mxu0 0
      %1046 = vmatprep.subr.bf16.mxu0 0
      %1047 = vmatpush1.bf16.msra.mxu0 0
      %1048 = vmatprep.subr.bf16.mxu0 0
      %1049 = vmatpush1.bf16.msra.mxu0 0
      %1050 = vmatprep.subr.bf16.mxu0 0
      %1051 = vmatpush1.bf16.msra.mxu0 0
      %1052 = vmatprep.subr.bf16.mxu0 0
      %1053 = vmatpush1.bf16.msra.mxu0 0
      %1054 = vmatprep.subr.bf16.mxu0 0
      %1055 = vmatpush1.bf16.msra.mxu0 0
      %1056 = vmatprep.subr.bf16.mxu0 0
      %1057 = vmatpush1.bf16.msra.mxu0 0
      %1058 = vmatprep.subr.bf16.mxu0 0
      %1059 = vmatpush1.bf16.msra.mxu0 0
      %1060 = vmatprep.subr.bf16.mxu0 0
      %1061 = vmatpush1.bf16.msra.mxu0 0
      %1062 = vmatprep.subr.bf16.mxu0 0
      %1063 = vmatpush1.bf16.msra.mxu0 0
      %1064 = vmatprep.subr.bf16.mxu0 0
      %1065 = vmatpush1.bf16.msra.mxu0 0
      %1066 = vmatprep.subr.bf16.mxu0 0
      %1067 = vmatpush1.bf16.msra.mxu0 0
      %1068 = vmatprep.mubr.bf16.mxu0 0
      %1069 = vmatmul.mubr.bf16.gmra.mrb[0].mxu0 %v1028
      %v1070 = vpop.f32.mrb[0].mxu0
      %v1071 = vadd.f32 0.0, %v1070
      %v1072 = vpop.f32.mrb[0].mxu0
      %v1073 = vadd.f32 0.0, %v1072
      %v1074 = vpop.f32.mrb[0].mxu0
      %v1075 = vpop.f32.mrb[0].mxu0
      %1076 = vdwg.mxu0
      %v1077 = vadd.f32 %v1014, %v1071
      %v1078 = vadd.f32 %v1015, %v1073
      %1079 = vrot.lane.b32.xlu0 %v636, 49
      %v1080 = vpop.permute.xlu0 %1079
      %1081 = vrot.lane.b32.xlu0 %v640, 49
      %v1082 = vpop.permute.xlu0 %1081
      %vm1083 = vcmask 400384
      %v1084 = vsel %vm1083, %v1080, %v1082
      %vm1085 = vcmp.ne.s16.totalorder %v1080, 0
      %vm1086 = vcmp.ne.s16.totalorder %v1084, 0
      %vm1087 = vcmp.ne.s16.totalorder %v1082, 0
      %v1088 = vsel %vm1085, %v426, 0
      %v1089 = vsel %vm1086, %v427, 0
      %v1090 = vsel %vm1087, %v428, 0
      %s1091 = scalar_lea.vmem %s3, 32
      %v1092 = vld [vmem:[%s1091] sm:$0xf]
      %1096 = vrot.lane.b32.xlu0 %v1088, 79
      %v1097 = vpop.permute.xlu0 %1096
      %1098 = vrot.lane.b32.xlu0 %v1089, 79
      %v1099 = vpop.permute.xlu0 %1098
      %1100 = vrot.lane.b32.xlu0 %v1090, 79
      %v1101 = vpop.permute.xlu0 %1100
      %vm1102 = vcmask 646144
      %v1103 = vsel %vm1102, %v1097, %v1099
      %v1104 = vsel %vm1102, %v1099, %v1101
      %v1106 = vsel %vm513, %v1092, 0
      %v1109 = vsel %vm517, %v1103, 0
      %v1112 = vsel %vm517, %v1104, 0
      %1114 = vmatprep.subr.bf16.mxu0 %v1112
      %1115 = vmatpush1.bf16.msra.mxu0 %v1109
      %1116 = vmatprep.subr.bf16.mxu0 0
      %1117 = vmatpush1.bf16.msra.mxu0 0
      %1118 = vmatprep.subr.bf16.mxu0 0
      %1119 = vmatpush1.bf16.msra.mxu0 0
      %1120 = vmatprep.subr.bf16.mxu0 0
      %1121 = vmatpush1.bf16.msra.mxu0 0
      %1122 = vmatprep.subr.bf16.mxu0 0
      %1123 = vmatpush1.bf16.msra.mxu0 0
      %1124 = vmatprep.subr.bf16.mxu0 0
      %1125 = vmatpush1.bf16.msra.mxu0 0
      %1126 = vmatprep.subr.bf16.mxu0 0
      %1127 = vmatpush1.bf16.msra.mxu0 0
      %1128 = vmatprep.subr.bf16.mxu0 0
      %1129 = vmatpush1.bf16.msra.mxu0 0
      %1130 = vmatprep.subr.bf16.mxu0 0
      %1131 = vmatpush1.bf16.msra.mxu0 0
      %1132 = vmatprep.subr.bf16.mxu0 0
      %1133 = vmatpush1.bf16.msra.mxu0 0
      %1134 = vmatprep.subr.bf16.mxu0 0
      %1135 = vmatpush1.bf16.msra.mxu0 0
      %1136 = vmatprep.subr.bf16.mxu0 0
      %1137 = vmatpush1.bf16.msra.mxu0 0
      %1138 = vmatprep.subr.bf16.mxu0 0
      %1139 = vmatpush1.bf16.msra.mxu0 0
      %1140 = vmatprep.subr.bf16.mxu0 0
      %1141 = vmatpush1.bf16.msra.mxu0 0
      %1142 = vmatprep.subr.bf16.mxu0 0
      %1143 = vmatpush1.bf16.msra.mxu0 0
      %1144 = vmatprep.subr.bf16.mxu0 0
      %1145 = vmatpush1.bf16.msra.mxu0 0
      %1146 = vmatprep.mubr.bf16.mxu0 0
      %1147 = vmatmul.mubr.bf16.gmra.mrb[0].mxu0 %v1106
      %v1148 = vpop.f32.mrb[0].mxu0
      %v1149 = vadd.f32 0.0, %v1148
      %v1150 = vpop.f32.mrb[0].mxu0
      %v1151 = vadd.f32 0.0, %v1150
      %v1152 = vpop.f32.mrb[0].mxu0
      %v1153 = vpop.f32.mrb[0].mxu0
      %1154 = vdwg.mxu0
      %v1155 = vadd.f32 %v1077, %v1149
      %v1156 = vadd.f32 %v1078, %v1151
      %v1157 = vld [vmem:[%s4] sm:$0xff]
      %1159 = vset.pattern.permute.xlu0 0
      %1160 = vperm.xlu0 %1159, %v1157
      %v1161 = vpop.permute.xlu0 %1160
      %v1163 = vadd.f32 %v1155, %v1161
      %v1164 = vadd.f32 %v1156, %v1161
      %v1165 = vmax.f32 %v1163, 0.0
      %v1166 = vmax.f32 %v1164, 0.0
      %v1169 = vrot.slane %v1165, 4
      %v1170 = vrot.slane %v1166, 4
      %1173 = vst [vmem:[%s380] sm:$0xf0] %v1169
      %1174 = vst [vmem:[%s380 + $0x8] sm:$0xf0] %v1170
      %1175 = vst [vmem:[%s380 + $0x10] sm:$0xf] %v1169
      %1176 = vst [vmem:[%s380 + $0x18] sm:$0xf] %v1170
      %s1177 = smul.u32 2, %s21
      %p1178 = scmp.lt.s32.totalorder %s20, 1
      %s1179 = scalar_select %p1178, %s20, 1
      %p1180 = scmp.lt.s32.totalorder %s1177, 1
      %s1181 = scalar_select %p1180, %s1177, 1
      %s1182 = smul.addr %s1179, 4
      %s1183 = sadd.s32 %s1181, %s1182
      %s1184 = smul.addr %s1183, 8
      %s1185 = scalar_lea.vmem %s5, %s1184
      // Predicated region
      $region41: #{tpu_custom_call.1} parent=39 // pred_check
        %p1186 = pneg %p190
      $region42: #{tpu_custom_call.1} parent=39 // pred_check_branch
        %1188 = sbr.rel (%p1186) target = $region44
      $region43: #{tpu_custom_call.1} parent=39 // pred_region
        %s1189 = smul.u32 2, %s21
      $region44: #{tpu_custom_call.1} parent=39 // pred_fallthru
        _
    $region40: #{tpu_custom_call.1} parent=5 // pred_fallthru
      _
    %p1190 = scmp.le.s32.totalorder 2, %s11
    // Predicated region
    $region45: #{tpu_custom_call.1} parent=5 // pred_check
      %p1191 = pneg %p1190
    $region46: #{tpu_custom_call.1} parent=5 // pred_check_branch
      %1193 = sbr.rel (%p1191) target = $region48
    $region47: #{tpu_custom_call.1} parent=5 // pred_region
      %s1194 = ssub.s32 %s11, 2
      // Predicated region
      $region49: #{tpu_custom_call.1} parent=47 // pred_check
        %p1195 = pneg %p196
      $region50: #{tpu_custom_call.1} parent=47 // pred_check_branch
        %1197 = sbr.rel (%p1195) target = $region52
      $region51: #{tpu_custom_call.1} parent=47 // pred_region
        %s1198 = smul.u32 2, %s23
        %p1199 = scmp.lt.s32.totalorder %s22, 1
        %s1200 = scalar_select %p1199, %s22, 1
        %p1201 = scmp.lt.s32.totalorder %s1198, 1
        %s1202 = scalar_select %p1201, %s1198, 1
        %s1203 = smul.addr %s1200, 4
        %s1204 = sadd.s32 %s1202, %s1203
        %s1205 = smul.addr %s1204, 8
        %s1206 = scalar_lea.vmem %s5, %s1205
      $region52: #{tpu_custom_call.1} parent=47 // pred_fallthru
        _
    $region48: #{tpu_custom_call.1} parent=5 // pred_fallthru
      _
  $region6: #{tpu_custom_call.1} parent=0 // loop_footer
    %s15 = sadd.s32 1, %s11
  $region7: #{tpu_custom_call.1} parent=0 // loop_footer_branch
    %10 = sbr.rel target = $region3
  $region8: #{tpu_custom_call.1} parent=0 // loop_exit
    _

</llo_original>
